<compile_context>
chip_gen: v6e
topology: v6e:2x2x1
jax: 0.10.0
libtpu: 0.0.40
codegen_flags: <defaults>
</compile_context>

<pallas_src>
import jax
import jax.numpy as jnp
import numpy as np
from jax.experimental import pallas as pl
from jax.experimental.pallas import tpu as pltpu


def _alpha_kernel(w2_ref, scal_ref, mix_ref, far_ref, out_ref):
    # w2_ref   : SMEM (K,)   linear2 FIR taps
    # scal_ref : SMEM (3,)   [w1_far, w1_mix, b2 + b1*sum(w2)]
    # mix_ref  : VMEM (Bb, 2, F, T_in)   T_in = T_out + K - 1 (causal front pad)
    # far_ref  : VMEM (Bb, 2, F, T_in)
    # out_ref  : VMEM (Bb, T_out)        lane/sublane-dense output slab
    k = w2_ref.shape[0]
    t_out = out_ref.shape[-1]

    # Cast in-kernel: callers may hold bf16 spectrograms; compute in f32.
    far = far_ref[...].astype(jnp.float32)          # (Bb, 2, F, T_in)
    mix = mix_ref[...].astype(jnp.float32)

    pow_far = far[:, 0] * far[:, 0] + far[:, 1] * far[:, 1]   # (Bb, F, T_in)
    pow_mix = mix[:, 0] * mix[:, 0] + mix[:, 1] * mix[:, 1]

    # linear1 weights applied elementwise, then ONE fused frequency reduction.
    w = scal_ref[0] * pow_far + scal_ref[1] * pow_mix          # (Bb, F, T_in)
    z = jnp.sum(w, axis=1)                                     # (Bb, T_in)

    # linear2 = K-tap causal FIR: conv[t] = sum_j w2[j] * z_front_padded[t + j].
    # The K-1 zero history is already in z (wrapper pads the time axis), so
    # each tap is a static lane-shifted slice — pure VPU/XLU, no MXU.
    acc = w2_ref[0] * z[:, 0:t_out]
    for j in range(1, k):
        acc = acc + w2_ref[j] * z[:, j:j + t_out]

    out_ref[...] = jnp.abs(acc + scal_ref[2])


def _round_up(x, m):
    return ((x + m - 1) // m) * m


def alpha_predictor(mix_comp, far_comp, w1, b1, w2, b2, *, batch_block=8):
    """AlphaPredictor.forward.  mix_comp/far_comp: (B, 2, F, T) -> (B, 1, 1, T) f32."""
    B, C, F, T = mix_comp.shape
    assert C == 2, "channel dim must hold [real, imag]"
    K = int(w2.shape[0])

    # Layout padding: F (sublane) -> multiple of 8, output T (lane) -> multiple
    # of 128.  The causal K-1 zero-history goes on the FRONT of the time axis
    # in the same pad, so the in-kernel FIR is plain static slices.
    F_pad = _round_up(F, 8)
    T_out = _round_up(T, 128)
    T_in = T_out + K - 1

    pad = ((0, 0), (0, 0), (0, F_pad - F), (K - 1, T_out - T))
    mix_p = jnp.pad(mix_comp, pad)            # native dtype kept; cast in-kernel
    far_p = jnp.pad(far_comp, pad)

    # Batch blocking: Bb batches per grid step (sublane-dense z / output).
    if B <= batch_block:
        Bb, B_pad = B, B
    else:
        Bb = batch_block
        B_pad = _round_up(B, Bb)
    if B_pad != B:
        bpad = ((0, B_pad - B), (0, 0), (0, 0), (0, 0))
        mix_p = jnp.pad(mix_p, bpad)
        far_p = jnp.pad(far_p, bpad)
    nb = B_pad // Bb

    # Scalar parameters in SMEM.  b1 is added to every window tap by the torch
    # module (padding happens before linear1), so it folds into one constant.
    w1f = jnp.asarray(w1, jnp.float32).reshape(2)
    w2f = jnp.asarray(w2, jnp.float32).reshape(K)
    bias_const = jnp.asarray(b2, jnp.float32) + jnp.asarray(b1, jnp.float32) * jnp.sum(w2f)
    scalars = jnp.stack([w1f[0], w1f[1], bias_const])

    # VMEM budget: 2 inputs x 2 pipeline buffers + 2 output buffers + slack.
    itemsize = jnp.dtype(mix_p.dtype).itemsize
    in_block = Bb * 2 * F_pad * T_in * itemsize
    out_block = Bb * T_out * 4
    vmem_bytes = int(max(2 * 2 * in_block + 2 * out_block + (2 << 20), 16 << 20))

    out2d = pl.pallas_call(
        _alpha_kernel,
        out_shape=jax.ShapeDtypeStruct((B_pad, T_out), jnp.float32),
        grid=(nb,),
        in_specs=[
            pl.BlockSpec(memory_space=pltpu.MemorySpace.SMEM),            # w2 taps
            pl.BlockSpec(memory_space=pltpu.MemorySpace.SMEM),            # [w1_far, w1_mix, bias]
            pl.BlockSpec((Bb, 2, F_pad, T_in), lambda b: (b, 0, 0, 0)),   # mix
            pl.BlockSpec((Bb, 2, F_pad, T_in), lambda b: (b, 0, 0, 0)),   # far
        ],
        out_specs=pl.BlockSpec((Bb, T_out), lambda b: (b, 0)),
        compiler_params=pltpu.CompilerParams(
            dimension_semantics=("parallel",),
            vmem_limit_bytes=vmem_bytes,
        ),
    )(w2f, scalars, mix_p, far_p)

    # Lane-dense 2-D kernel output -> torch-shaped (B, 1, 1, T).
    return out2d[:B, :T][:, None, None, :]


def alpha_predictor_ref(mix_comp, far_comp, w1, b1, w2, b2):
    """Pure-JAX line-by-line translation of the PyTorch forward (ground truth)."""
    B, _, F, T = mix_comp.shape
    K = w2.shape[0]

    def unfold_t(x):  # F.pad(x, (K-1, 0)).unfold(3, K, 1): (B,2,F,T) -> (B,2,F,T,K)
        xp = jnp.pad(x, ((0, 0), (0, 0), (0, 0), (K - 1, 0)))
        return jnp.stack([xp[..., t:t + K] for t in range(T)], axis=3)

    far_u = unfold_t(far_comp)
    mix_u = unfold_t(mix_comp)
    pow_far = far_u[:, 0] ** 2 + far_u[:, 1] ** 2              # (B, F, T, K)
    pow_mix = mix_u[:, 0] ** 2 + mix_u[:, 1] ** 2
    inp = jnp.stack([pow_far, pow_mix], axis=-1)[:, None]      # (B, 1, F, T, K, 2)
    summed = jnp.sum(inp, axis=2, keepdims=True)               # (B, 1, 1, T, K, 2)
    out = jnp.einsum("...i,i->...", summed, w1) + b1           # (B, 1, 1, T, K)  linear1
    out = jnp.einsum("...k,k->...", out, w2) + b2              # (B, 1, 1, T)     linear2
    return jnp.abs(out)


if __name__ == "__main__":
    B, F, T, K = 2, 16, 16, 8

    key = jax.random.PRNGKey(0)
    k1, k2, k3, k4, k5, k6 = jax.random.split(key, 6)
    # Synthetic nn.Linear(2,1) / nn.Linear(k,1) parameters.
    w1 = (jax.random.normal(k1, (2,)) * 0.5).astype(jnp.float32)   # linear1.weight
    b1 = (jax.random.normal(k2, ()) * 0.1).astype(jnp.float32)     # linear1.bias
    w2 = (jax.random.normal(k3, (K,)) * 0.5).astype(jnp.float32)   # linear2.weight
    b2 = (jax.random.normal(k4, ()) * 0.1).astype(jnp.float32)     # linear2.bias

    mix_comp = jax.random.normal(k5, (B, 2, F, T), dtype=jnp.float32)
    far_comp = jax.random.normal(k6, (B, 2, F, T), dtype=jnp.float32)

    out = jax.block_until_ready(alpha_predictor(mix_comp, far_comp, w1, b1, w2, b2))
    ref = jax.block_until_ready(alpha_predictor_ref(mix_comp, far_comp, w1, b1, w2, b2))

    assert out.shape == (B, 1, 1, T)
    np.testing.assert_allclose(np.asarray(out), np.asarray(ref), rtol=1e-5, atol=5e-5)

    print("KERNEL_OK")
</pallas_src>

<mosaic_0001>
module attributes {stable_mosaic.version = 11 : i64} {
  func.func @_alpha_kernel(%arg0: i32, %arg1: memref<8xf32, #tpu.memory_space<smem>>, %arg2: memref<3xf32, #tpu.memory_space<smem>>, %arg3: memref<2x2x16x135xf32, #tpu.memory_space<vmem>>, %arg4: memref<2x2x16x135xf32, #tpu.memory_space<vmem>>, %arg5: memref<2x128xf32, #tpu.memory_space<vmem>>) attributes {dimension_semantics = [#tpu.dimension_semantics<parallel>], iteration_bounds = array<i64: 1>, scalar_prefetch = 0 : i64, scratch_operands = 0 : i64, tpu.core_type = #tpu.core_type<tc>, window_params = [{transform_indices = @transform_0, window_bounds = array<i64: 8>}, {transform_indices = @transform_1, window_bounds = array<i64: 3>}, {transform_indices = @transform_2, window_bounds = array<i64: 2, 2, 16, 135>}, {transform_indices = @transform_3, window_bounds = array<i64: 2, 2, 16, 135>}, {transform_indices = @transform_4, window_bounds = array<i64: 2, 128>}]} {
    %c0 = arith.constant 0 : index
    %c0_0 = arith.constant 0 : index
    %c0_1 = arith.constant 0 : index
    %c0_2 = arith.constant 0 : index
    %0 = vector.load %arg4[%c0, %c0_0, %c0_1, %c0_2] : memref<2x2x16x135xf32, #tpu.memory_space<vmem>>, vector<2x2x16x135xf32>
    %c0_3 = arith.constant 0 : index
    %c0_4 = arith.constant 0 : index
    %c0_5 = arith.constant 0 : index
    %c0_6 = arith.constant 0 : index
    %1 = vector.load %arg3[%c0_3, %c0_4, %c0_5, %c0_6] : memref<2x2x16x135xf32, #tpu.memory_space<vmem>>, vector<2x2x16x135xf32>
    %2 = vector.extract_strided_slice %0 {offsets = [0, 0, 0, 0], sizes = [2, 1, 16, 135], strides = [1, 1, 1, 1]} : vector<2x2x16x135xf32> to vector<2x1x16x135xf32>
    %3 = vector.shape_cast %2 : vector<2x1x16x135xf32> to vector<2x16x135xf32>
    %4 = vector.extract_strided_slice %0 {offsets = [0, 0, 0, 0], sizes = [2, 1, 16, 135], strides = [1, 1, 1, 1]} : vector<2x2x16x135xf32> to vector<2x1x16x135xf32>
    %5 = vector.shape_cast %4 : vector<2x1x16x135xf32> to vector<2x16x135xf32>
    %6 = arith.mulf %3, %5 : vector<2x16x135xf32>
    %7 = vector.extract_strided_slice %0 {offsets = [0, 1, 0, 0], sizes = [2, 1, 16, 135], strides = [1, 1, 1, 1]} : vector<2x2x16x135xf32> to vector<2x1x16x135xf32>
    %8 = vector.shape_cast %7 : vector<2x1x16x135xf32> to vector<2x16x135xf32>
    %9 = vector.extract_strided_slice %0 {offsets = [0, 1, 0, 0], sizes = [2, 1, 16, 135], strides = [1, 1, 1, 1]} : vector<2x2x16x135xf32> to vector<2x1x16x135xf32>
    %10 = vector.shape_cast %9 : vector<2x1x16x135xf32> to vector<2x16x135xf32>
    %11 = arith.mulf %8, %10 : vector<2x16x135xf32>
    %12 = arith.addf %6, %11 : vector<2x16x135xf32>
    %13 = vector.extract_strided_slice %1 {offsets = [0, 0, 0, 0], sizes = [2, 1, 16, 135], strides = [1, 1, 1, 1]} : vector<2x2x16x135xf32> to vector<2x1x16x135xf32>
    %14 = vector.shape_cast %13 : vector<2x1x16x135xf32> to vector<2x16x135xf32>
    %15 = vector.extract_strided_slice %1 {offsets = [0, 0, 0, 0], sizes = [2, 1, 16, 135], strides = [1, 1, 1, 1]} : vector<2x2x16x135xf32> to vector<2x1x16x135xf32>
    %16 = vector.shape_cast %15 : vector<2x1x16x135xf32> to vector<2x16x135xf32>
    %17 = arith.mulf %14, %16 : vector<2x16x135xf32>
    %18 = vector.extract_strided_slice %1 {offsets = [0, 1, 0, 0], sizes = [2, 1, 16, 135], strides = [1, 1, 1, 1]} : vector<2x2x16x135xf32> to vector<2x1x16x135xf32>
    %19 = vector.shape_cast %18 : vector<2x1x16x135xf32> to vector<2x16x135xf32>
    %20 = vector.extract_strided_slice %1 {offsets = [0, 1, 0, 0], sizes = [2, 1, 16, 135], strides = [1, 1, 1, 1]} : vector<2x2x16x135xf32> to vector<2x1x16x135xf32>
    %21 = vector.shape_cast %20 : vector<2x1x16x135xf32> to vector<2x16x135xf32>
    %22 = arith.mulf %19, %21 : vector<2x16x135xf32>
    %23 = arith.addf %17, %22 : vector<2x16x135xf32>
    %c0_7 = arith.constant 0 : index
    %24 = memref.load %arg2[%c0_7] : memref<3xf32, #tpu.memory_space<smem>>
    %25 = vector.broadcast %24 : f32 to vector<2x16x135xf32>
    %26 = arith.mulf %25, %12 : vector<2x16x135xf32>
    %c1 = arith.constant 1 : index
    %27 = memref.load %arg2[%c1] : memref<3xf32, #tpu.memory_space<smem>>
    %28 = vector.broadcast %27 : f32 to vector<2x16x135xf32>
    %29 = arith.mulf %28, %23 : vector<2x16x135xf32>
    %30 = arith.addf %26, %29 : vector<2x16x135xf32>
    %cst = arith.constant dense<0.000000e+00> : vector<2x135xf32>
    %31 = vector.multi_reduction <add>, %30, %cst [1] : vector<2x16x135xf32> to vector<2x135xf32>
    %c0_8 = arith.constant 0 : index
    %32 = memref.load %arg1[%c0_8] : memref<8xf32, #tpu.memory_space<smem>>
    %33 = vector.extract_strided_slice %31 {offsets = [0, 0], sizes = [2, 128], strides = [1, 1]} : vector<2x135xf32> to vector<2x128xf32>
    %34 = vector.broadcast %32 : f32 to vector<2x128xf32>
    %35 = arith.mulf %34, %33 : vector<2x128xf32>
    %c1_9 = arith.constant 1 : index
    %36 = memref.load %arg1[%c1_9] : memref<8xf32, #tpu.memory_space<smem>>
    %37 = vector.extract_strided_slice %31 {offsets = [0, 1], sizes = [2, 128], strides = [1, 1]} : vector<2x135xf32> to vector<2x128xf32>
    %38 = vector.broadcast %36 : f32 to vector<2x128xf32>
    %39 = arith.mulf %38, %37 : vector<2x128xf32>
    %40 = arith.addf %35, %39 : vector<2x128xf32>
    %c2 = arith.constant 2 : index
    %41 = memref.load %arg1[%c2] : memref<8xf32, #tpu.memory_space<smem>>
    %42 = vector.extract_strided_slice %31 {offsets = [0, 2], sizes = [2, 128], strides = [1, 1]} : vector<2x135xf32> to vector<2x128xf32>
    %43 = vector.broadcast %41 : f32 to vector<2x128xf32>
    %44 = arith.mulf %43, %42 : vector<2x128xf32>
    %45 = arith.addf %40, %44 : vector<2x128xf32>
    %c3 = arith.constant 3 : index
    %46 = memref.load %arg1[%c3] : memref<8xf32, #tpu.memory_space<smem>>
    %47 = vector.extract_strided_slice %31 {offsets = [0, 3], sizes = [2, 128], strides = [1, 1]} : vector<2x135xf32> to vector<2x128xf32>
    %48 = vector.broadcast %46 : f32 to vector<2x128xf32>
    %49 = arith.mulf %48, %47 : vector<2x128xf32>
    %50 = arith.addf %45, %49 : vector<2x128xf32>
    %c4 = arith.constant 4 : index
    %51 = memref.load %arg1[%c4] : memref<8xf32, #tpu.memory_space<smem>>
    %52 = vector.extract_strided_slice %31 {offsets = [0, 4], sizes = [2, 128], strides = [1, 1]} : vector<2x135xf32> to vector<2x128xf32>
    %53 = vector.broadcast %51 : f32 to vector<2x128xf32>
    %54 = arith.mulf %53, %52 : vector<2x128xf32>
    %55 = arith.addf %50, %54 : vector<2x128xf32>
    %c5 = arith.constant 5 : index
    %56 = memref.load %arg1[%c5] : memref<8xf32, #tpu.memory_space<smem>>
    %57 = vector.extract_strided_slice %31 {offsets = [0, 5], sizes = [2, 128], strides = [1, 1]} : vector<2x135xf32> to vector<2x128xf32>
    %58 = vector.broadcast %56 : f32 to vector<2x128xf32>
    %59 = arith.mulf %58, %57 : vector<2x128xf32>
    %60 = arith.addf %55, %59 : vector<2x128xf32>
    %c6 = arith.constant 6 : index
    %61 = memref.load %arg1[%c6] : memref<8xf32, #tpu.memory_space<smem>>
    %62 = vector.extract_strided_slice %31 {offsets = [0, 6], sizes = [2, 128], strides = [1, 1]} : vector<2x135xf32> to vector<2x128xf32>
    %63 = vector.broadcast %61 : f32 to vector<2x128xf32>
    %64 = arith.mulf %63, %62 : vector<2x128xf32>
    %65 = arith.addf %60, %64 : vector<2x128xf32>
    %c7 = arith.constant 7 : index
    %66 = memref.load %arg1[%c7] : memref<8xf32, #tpu.memory_space<smem>>
    %67 = vector.extract_strided_slice %31 {offsets = [0, 7], sizes = [2, 128], strides = [1, 1]} : vector<2x135xf32> to vector<2x128xf32>
    %68 = vector.broadcast %66 : f32 to vector<2x128xf32>
    %69 = arith.mulf %68, %67 : vector<2x128xf32>
    %70 = arith.addf %65, %69 : vector<2x128xf32>
    %c2_10 = arith.constant 2 : index
    %71 = memref.load %arg2[%c2_10] : memref<3xf32, #tpu.memory_space<smem>>
    %72 = vector.broadcast %71 : f32 to vector<2x128xf32>
    %73 = arith.addf %70, %72 : vector<2x128xf32>
    %74 = math.absf %73 : vector<2x128xf32>
    %c0_11 = arith.constant 0 : index
    %c0_12 = arith.constant 0 : index
    %75 = vector.load %arg5[%c0_11, %c0_12] : memref<2x128xf32, #tpu.memory_space<vmem>>, vector<2x128xf32>
    tpu.vector_store %arg5[%c0_11, %c0_12], %74 {strides = array<i32>} : memref<2x128xf32, #tpu.memory_space<vmem>>, vector<2x128xf32>,
    return
  }
  func.func @transform_0(%arg0: i32) -> i32 {
    %c0_i32 = arith.constant 0 : i32
    %c0_i32_0 = arith.constant 0 : i32
    return %c0_i32 : i32
  }
  func.func @transform_1(%arg0: i32) -> i32 {
    %c0_i32 = arith.constant 0 : i32
    %c0_i32_0 = arith.constant 0 : i32
    return %c0_i32 : i32
  }
  func.func @transform_2(%arg0: i32) -> (i32, i32, i32, i32) {
    %c0_i32 = arith.constant 0 : i32
    %c0_i32_0 = arith.constant 0 : i32
    %c0_i32_1 = arith.constant 0 : i32
    %c0_i32_2 = arith.constant 0 : i32
    return %arg0, %c0_i32, %c0_i32_0, %c0_i32_1 : i32, i32, i32, i32
  }
  func.func @transform_3(%arg0: i32) -> (i32, i32, i32, i32) {
    %c0_i32 = arith.constant 0 : i32
    %c0_i32_0 = arith.constant 0 : i32
    %c0_i32_1 = arith.constant 0 : i32
    %c0_i32_2 = arith.constant 0 : i32
    return %arg0, %c0_i32, %c0_i32_0, %c0_i32_1 : i32, i32, i32, i32
  }
  func.func @transform_4(%arg0: i32) -> (i32, i32) {
    %c0_i32 = arith.constant 0 : i32
    %c0_i32_0 = arith.constant 0 : i32
    return %arg0, %c0_i32 : i32, i32
  }
}

</mosaic_0001>

<llo_original>
// kernel: tpu_custom_call.1
$region0: #{tpu_custom_call.1}
  #allocation0 [shape = 'u32[]', space=smem, size = 0x4, offset = 0x4, fixed_abs, tag = 'smem constant byte address 0x4 - core index']
  #allocation1 [shape = 'u32[144,128]{1,0:T(1,128)}', space=vmem, size = 0x12000, scoped, tag = 'internal scratch']
  %s0 = inlined_call_operand.hbm [shape: f32[8], index: 0, kind: input, shape index: {}]
  %s1 = inlined_call_operand.vmem [shape: f32[3], index: 1, kind: input, shape index: {}]
  %s2 = inlined_call_operand.hbm [shape: f32[2,2,16,135], index: 2, kind: input, shape index: {}]
  %s3 = inlined_call_operand.hbm [shape: f32[2,2,16,135], index: 3, kind: input, shape index: {}]
  %s4 = inlined_call_operand.hbm [shape: f32[2,128], index: 4, kind: output, shape index: {}]
  %s5 = sld [smem:[#allocation0]]
  $region42: #{tpu_custom_call.1} parent=0
    _
  %s7 = ssub.s32 1, %s5
  %s8 = scalar_select 0, %s7, %s5
  $region1: #{tpu_custom_call.1} parent=0
    #allocation2 [shape = 'u8[512]{0}', space=smem, size = 0x200, scoped, tag = 'input window, operand 0, single buffered']
    #allocation3 [shape = 's32[1]{0}', space=sflag, size = 0x4, scoped, tag = 'scoped memory for tpu_custom_call.1']
    #allocation4 [shape = 's32[1]{0}', space=sflag, size = 0x4, scoped, tag = 'scoped memory for tpu_custom_call.1']
    #allocation5 [shape = 's32[1]{0}', space=sflag, size = 0x4, scoped, tag = 'scoped memory for tpu_custom_call.1']
    #allocation6 [shape = 's32[1]{0}', space=sflag, size = 0x4, scoped, tag = 'scoped memory for tpu_custom_call.1']
    #allocation7 [shape = 'u8[512]{0}', space=smem, size = 0x200, scoped, tag = 'input window, operand 1, single buffered']
    #allocation8 [shape = 'u8[65536]{0}', space=vmem, size = 0x10000, scoped, tag = 'input window, operand 2, single buffered']
    #allocation9 [shape = 'u8[65536]{0}', space=vmem, size = 0x10000, scoped, tag = 'input window, operand 3, single buffered']
    #allocation10 [shape = 's32[1]{0}', space=sflag, size = 0x4, scoped, tag = 'scoped memory for tpu_custom_call.1']
    #allocation11 [shape = 'u8[1024]{0}', space=vmem, size = 0x400, scoped, tag = 'output window, operand 0, single buffered']
    %9 = vsyncpa [#allocation5], 0
    %10 = vsyncpa [#allocation6], 0
    %11 = vsyncpa [#allocation3], 0
    %12 = vsyncpa [#allocation10], 0
    %13 = vsyncpa [#allocation4], 0
    // Predicated region
    $region2: #{tpu_custom_call.1} parent=1 // pred_check
      _
    $region3: #{tpu_custom_call.1} parent=1 // pred_check_branch
      %15 = sbr.rel (0) target = $region5
    $region4: #{tpu_custom_call.1} parent=1 // pred_region
      %s17 = ssub.s32 16, 16
      %18 = vsyncadd [#allocation5], %s17
      %21 = dma.hbm_to_smem %s0, 16, [#allocation2], [#allocation5]
    $region5: #{tpu_custom_call.1} parent=1 // pred_fallthru
      _
    // Predicated region
    $region6: #{tpu_custom_call.1} parent=1 // pred_check
      _
    $region7: #{tpu_custom_call.1} parent=1 // pred_check_branch
      %23 = sbr.rel (0) target = $region9
    $region8: #{tpu_custom_call.1} parent=1 // pred_region
      %s25 = ssub.s32 16, 16
      %26 = vsyncadd [#allocation6], %s25
      %s28 = sshll.u32 %s1, 4
      %s29 = int_to_ptr.vmem [resolvable:$true] %s28
      %31 = dma.vmem_to_smem %s29, 16, [#allocation7], [#allocation6]
    $region9: #{tpu_custom_call.1} parent=1 // pred_fallthru
      _
    // Predicated region
    $region10: #{tpu_custom_call.1} parent=1 // pred_check
      _
    $region11: #{tpu_custom_call.1} parent=1 // pred_check_branch
      %33 = sbr.rel (0) target = $region13
    $region12: #{tpu_custom_call.1} parent=1 // pred_region
      %s35 = ssub.s32 2048, 2048
      %36 = vsyncadd [#allocation3], %s35
      %s37 = sshll.u32 [#allocation8], 4
      %s38 = int_to_ptr.vmem [resolvable:$true] %s37
      %43 = dma.hbm_to_vmem [thread:$0]  %s2, 2048, %s38, [#allocation3], 256, 256, 16
    $region13: #{tpu_custom_call.1} parent=1 // pred_fallthru
      _
    // Predicated region
    $region14: #{tpu_custom_call.1} parent=1 // pred_check
      _
    $region15: #{tpu_custom_call.1} parent=1 // pred_check_branch
      %45 = sbr.rel (0) target = $region17
    $region16: #{tpu_custom_call.1} parent=1 // pred_region
      %s47 = ssub.s32 2048, 2048
      %48 = vsyncadd [#allocation10], %s47
      %s49 = sshll.u32 [#allocation9], 4
      %s50 = int_to_ptr.vmem [resolvable:$true] %s49
      %55 = dma.hbm_to_vmem [thread:$0]  %s3, 2048, %s50, [#allocation10], 256, 256, 16
    $region17: #{tpu_custom_call.1} parent=1 // pred_fallthru
      _
    // Predicated region
    $region18: #{tpu_custom_call.1} parent=1 // pred_check
      _
    $region19: #{tpu_custom_call.1} parent=1 // pred_check_branch
      %57 = sbr.rel (0) target = $region21
    $region20: #{tpu_custom_call.1} parent=1 // pred_region
      %58 = dma.done [#allocation5], 16
    $region21: #{tpu_custom_call.1} parent=1 // pred_fallthru
      _
    // Predicated region
    $region22: #{tpu_custom_call.1} parent=1 // pred_check
      _
    $region23: #{tpu_custom_call.1} parent=1 // pred_check_branch
      %60 = sbr.rel (0) target = $region25
    $region24: #{tpu_custom_call.1} parent=1 // pred_region
      %61 = dma.done [#allocation6], 16
    $region25: #{tpu_custom_call.1} parent=1 // pred_fallthru
      _
    // Predicated region
    $region26: #{tpu_custom_call.1} parent=1 // pred_check
      _
    $region27: #{tpu_custom_call.1} parent=1 // pred_check_branch
      %63 = sbr.rel (0) target = $region29
    $region28: #{tpu_custom_call.1} parent=1 // pred_region
      %64 = dma.done [#allocation3], 2048
    $region29: #{tpu_custom_call.1} parent=1 // pred_fallthru
      _
    // Predicated region
    $region30: #{tpu_custom_call.1} parent=1 // pred_check
      _
    $region31: #{tpu_custom_call.1} parent=1 // pred_check_branch
      %66 = sbr.rel (0) target = $region33
    $region32: #{tpu_custom_call.1} parent=1 // pred_region
      %67 = dma.done [#allocation10], 2048
    $region33: #{tpu_custom_call.1} parent=1 // pred_fallthru
      _
    %68 = sfence
    %v69 = vld [vmem:[#allocation9] sm:$0xff]
    %v70 = vld [vmem:[#allocation9 + $0x8] sm:$0xff]
    %v71 = vld [vmem:[#allocation9 + $0x10] sm:$0xff]
    %v72 = vld [vmem:[#allocation9 + $0x18] sm:$0xff]
    %v73 = vld [vmem:[#allocation9 + $0x20] sm:$0xff]
    %v74 = vld [vmem:[#allocation9 + $0x28] sm:$0xff]
    %v75 = vld [vmem:[#allocation9 + $0x30] sm:$0xff]
    %v76 = vld [vmem:[#allocation9 + $0x38] sm:$0xff]
    %v77 = vld [vmem:[#allocation9 + $0x40] sm:$0xff]
    %v78 = vld [vmem:[#allocation9 + $0x48] sm:$0xff]
    %v79 = vld [vmem:[#allocation9 + $0x50] sm:$0xff]
    %v80 = vld [vmem:[#allocation9 + $0x58] sm:$0xff]
    %v81 = vld [vmem:[#allocation9 + $0x60] sm:$0xff]
    %v82 = vld [vmem:[#allocation9 + $0x68] sm:$0xff]
    %v83 = vld [vmem:[#allocation9 + $0x70] sm:$0xff]
    %v84 = vld [vmem:[#allocation9 + $0x78] sm:$0xff]
    %v85 = vld [vmem:[#allocation8] sm:$0xff]
    %v86 = vld [vmem:[#allocation8 + $0x8] sm:$0xff]
    %v87 = vld [vmem:[#allocation8 + $0x10] sm:$0xff]
    %v88 = vld [vmem:[#allocation8 + $0x18] sm:$0xff]
    %v89 = vld [vmem:[#allocation8 + $0x20] sm:$0xff]
    %v90 = vld [vmem:[#allocation8 + $0x28] sm:$0xff]
    %v91 = vld [vmem:[#allocation8 + $0x30] sm:$0xff]
    %v92 = vld [vmem:[#allocation8 + $0x38] sm:$0xff]
    %v93 = vld [vmem:[#allocation8 + $0x40] sm:$0xff]
    %v94 = vld [vmem:[#allocation8 + $0x48] sm:$0xff]
    %v95 = vld [vmem:[#allocation8 + $0x50] sm:$0xff]
    %v96 = vld [vmem:[#allocation8 + $0x58] sm:$0xff]
    %v97 = vld [vmem:[#allocation8 + $0x60] sm:$0xff]
    %v98 = vld [vmem:[#allocation8 + $0x68] sm:$0xff]
    %v99 = vld [vmem:[#allocation8 + $0x70] sm:$0xff]
    %v100 = vld [vmem:[#allocation8 + $0x78] sm:$0xff]
    %v101 = vmul.f32 %v69, %v69
    %v102 = vmul.f32 %v70, %v70
    %v103 = vmul.f32 %v71, %v71
    %v104 = vmul.f32 %v72, %v72
    %v105 = vmul.f32 %v77, %v77
    %v106 = vmul.f32 %v78, %v78
    %v107 = vmul.f32 %v79, %v79
    %v108 = vmul.f32 %v80, %v80
    %v109 = vmul.f32 %v73, %v73
    %v110 = vmul.f32 %v74, %v74
    %v111 = vmul.f32 %v75, %v75
    %v112 = vmul.f32 %v76, %v76
    %v113 = vmul.f32 %v81, %v81
    %v114 = vmul.f32 %v82, %v82
    %v115 = vmul.f32 %v83, %v83
    %v116 = vmul.f32 %v84, %v84
    %v117 = vadd.f32 %v101, %v109
    %v118 = vadd.f32 %v102, %v110
    %v119 = vadd.f32 %v103, %v111
    %v120 = vadd.f32 %v104, %v112
    %v121 = vadd.f32 %v105, %v113
    %v122 = vadd.f32 %v106, %v114
    %v123 = vadd.f32 %v107, %v115
    %v124 = vadd.f32 %v108, %v116
    %v125 = vmul.f32 %v85, %v85
    %v126 = vmul.f32 %v86, %v86
    %v127 = vmul.f32 %v87, %v87
    %v128 = vmul.f32 %v88, %v88
    %v129 = vmul.f32 %v93, %v93
    %v130 = vmul.f32 %v94, %v94
    %v131 = vmul.f32 %v95, %v95
    %v132 = vmul.f32 %v96, %v96
    %v133 = vmul.f32 %v89, %v89
    %v134 = vmul.f32 %v90, %v90
    %v135 = vmul.f32 %v91, %v91
    %v136 = vmul.f32 %v92, %v92
    %v137 = vmul.f32 %v97, %v97
    %v138 = vmul.f32 %v98, %v98
    %v139 = vmul.f32 %v99, %v99
    %v140 = vmul.f32 %v100, %v100
    %v141 = vadd.f32 %v125, %v133
    %v142 = vadd.f32 %v126, %v134
    %v143 = vadd.f32 %v127, %v135
    %v144 = vadd.f32 %v128, %v136
    %v145 = vadd.f32 %v129, %v137
    %v146 = vadd.f32 %v130, %v138
    %v147 = vadd.f32 %v131, %v139
    %v148 = vadd.f32 %v132, %v140
    %s149 = sld [smem:[#allocation7]]
    %v150 = vstv %s149
    %v151 = vmul.f32 %v150, %v117
    %v152 = vmul.f32 %v150, %v118
    %v153 = vmul.f32 %v150, %v119
    %v154 = vmul.f32 %v150, %v120
    %v155 = vmul.f32 %v150, %v121
    %v156 = vmul.f32 %v150, %v122
    %v157 = vmul.f32 %v150, %v123
    %v158 = vmul.f32 %v150, %v124
    %s159 = sld [smem:[#allocation7 + $0x1]]
    %v160 = vstv %s159
    %v161 = vmul.f32 %v160, %v141
    %v162 = vmul.f32 %v160, %v142
    %v163 = vmul.f32 %v160, %v143
    %v164 = vmul.f32 %v160, %v144
    %v165 = vmul.f32 %v160, %v145
    %v166 = vmul.f32 %v160, %v146
    %v167 = vmul.f32 %v160, %v147
    %v168 = vmul.f32 %v160, %v148
    %v169 = vadd.f32 %v151, %v161
    %v170 = vadd.f32 %v152, %v162
    %v171 = vadd.f32 %v153, %v163
    %v172 = vadd.f32 %v154, %v164
    %v173 = vadd.f32 %v155, %v165
    %v174 = vadd.f32 %v156, %v166
    %v175 = vadd.f32 %v157, %v167
    %v176 = vadd.f32 %v158, %v168
    %v177 = vadd.f32 %v169, %v171
    %v178 = vrot.slane %v177, 4
    %v179 = vadd.f32 %v177, %v178
    %v180 = vrot.slane %v179, 2
    %v181 = vadd.f32 %v179, %v180
    %v182 = vrot.slane %v181, 1
    %v183 = vadd.f32 %v181, %v182
    %vm184 = vcmask 56320
    %v185 = vsel %vm184, %v170, 0.0
    %v186 = vsel %vm184, %v172, 0.0
    %v187 = vadd.f32 %v185, %v186
    %v188 = vrot.slane %v187, 4
    %v189 = vadd.f32 %v187, %v188
    %v190 = vrot.slane %v189, 2
    %v191 = vadd.f32 %v189, %v190
    %v192 = vrot.slane %v191, 1
    %v193 = vadd.f32 %v191, %v192
    %v194 = vadd.f32 %v173, %v175
    %v195 = vrot.slane %v194, 4
    %v196 = vadd.f32 %v194, %v195
    %v197 = vrot.slane %v196, 2
    %v198 = vadd.f32 %v196, %v197
    %v199 = vrot.slane %v198, 1
    %v200 = vadd.f32 %v198, %v199
    %v201 = vsel %vm184, %v174, 0.0
    %v202 = vsel %vm184, %v176, 0.0
    %v203 = vadd.f32 %v201, %v202
    %v204 = vrot.slane %v203, 4
    %v205 = vadd.f32 %v203, %v204
    %v206 = vrot.slane %v205, 2
    %v207 = vadd.f32 %v205, %v206
    %v208 = vrot.slane %v207, 1
    %v209 = vadd.f32 %v207, %v208
    %s210 = sld [smem:[#allocation2]]
    %v211 = vstv %s210
    %v212 = vmul.f32 %v211, %v183
    %v213 = vmul.f32 %v211, %v200
    %s214 = sld [smem:[#allocation2 + $0x1]]
    %v215 = vstv %s214
    %v216 = vmul.f32 %v215, %v183
    %v217 = vmul.f32 %v215, %v193
    %v218 = vmul.f32 %v215, %v200
    %v219 = vmul.f32 %v215, %v209
    %224 = vrot.lane.b32.xlu0 %v216, 127
    %v225 = vpop.permute.xlu0 %224
    %226 = vrot.lane.b32.xlu0 %v217, 127
    %v227 = vpop.permute.xlu0 %226
    %228 = vrot.lane.b32.xlu0 %v218, 127
    %v229 = vpop.permute.xlu0 %228
    %230 = vrot.lane.b32.xlu0 %v219, 127
    %v231 = vpop.permute.xlu0 %230
    %vm232 = vcmask 1039360
    %v233 = vsel %vm232, %v225, %v227
    %v234 = vsel %vm232, %v229, %v231
    %v237 = vadd.f32 %v212, %v233
    %v238 = vadd.f32 %v213, %v234
    %s239 = sld [smem:[#allocation2 + $0x2]]
    %v240 = vstv %s239
    %v241 = vmul.f32 %v240, %v183
    %v242 = vmul.f32 %v240, %v193
    %v243 = vmul.f32 %v240, %v200
    %v244 = vmul.f32 %v240, %v209
    %249 = vrot.lane.b32.xlu0 %v241, 126
    %v250 = vpop.permute.xlu0 %249
    %251 = vrot.lane.b32.xlu0 %v242, 126
    %v252 = vpop.permute.xlu0 %251
    %253 = vrot.lane.b32.xlu0 %v243, 126
    %v254 = vpop.permute.xlu0 %253
    %255 = vrot.lane.b32.xlu0 %v244, 126
    %v256 = vpop.permute.xlu0 %255
    %vm257 = vcmask 1031168
    %v258 = vsel %vm257, %v250, %v252
    %v259 = vsel %vm257, %v254, %v256
    %v262 = vadd.f32 %v237, %v258
    %v263 = vadd.f32 %v238, %v259
    %s264 = sld [smem:[#allocation2 + $0x3]]
    %v265 = vstv %s264
    %v266 = vmul.f32 %v265, %v183
    %v267 = vmul.f32 %v265, %v193
    %v268 = vmul.f32 %v265, %v200
    %v269 = vmul.f32 %v265, %v209
    %274 = vrot.lane.b32.xlu0 %v266, 125
    %v275 = vpop.permute.xlu0 %274
    %276 = vrot.lane.b32.xlu0 %v267, 125
    %v277 = vpop.permute.xlu0 %276
    %278 = vrot.lane.b32.xlu0 %v268, 125
    %v279 = vpop.permute.xlu0 %278
    %280 = vrot.lane.b32.xlu0 %v269, 125
    %v281 = vpop.permute.xlu0 %280
    %vm282 = vcmask 1022976
    %v283 = vsel %vm282, %v275, %v277
    %v284 = vsel %vm282, %v279, %v281
    %v287 = vadd.f32 %v262, %v283
    %v288 = vadd.f32 %v263, %v284
    %s289 = sld [smem:[#allocation2 + $0x4]]
    %v290 = vstv %s289
    %v291 = vmul.f32 %v290, %v183
    %v292 = vmul.f32 %v290, %v193
    %v293 = vmul.f32 %v290, %v200
    %v294 = vmul.f32 %v290, %v209
    %299 = vrot.lane.b32.xlu0 %v291, 124
    %v300 = vpop.permute.xlu0 %299
    %301 = vrot.lane.b32.xlu0 %v292, 124
    %v302 = vpop.permute.xlu0 %301
    %303 = vrot.lane.b32.xlu0 %v293, 124
    %v304 = vpop.permute.xlu0 %303
    %305 = vrot.lane.b32.xlu0 %v294, 124
    %v306 = vpop.permute.xlu0 %305
    %vm307 = vcmask 1014784
    %v308 = vsel %vm307, %v300, %v302
    %v309 = vsel %vm307, %v304, %v306
    %v312 = vadd.f32 %v287, %v308
    %v313 = vadd.f32 %v288, %v309
    %s314 = sld [smem:[#allocation2 + $0x5]]
    %v315 = vstv %s314
    %v316 = vmul.f32 %v315, %v183
    %v317 = vmul.f32 %v315, %v193
    %v318 = vmul.f32 %v315, %v200
    %v319 = vmul.f32 %v315, %v209
    %324 = vrot.lane.b32.xlu0 %v316, 123
    %v325 = vpop.permute.xlu0 %324
    %326 = vrot.lane.b32.xlu0 %v317, 123
    %v327 = vpop.permute.xlu0 %326
    %328 = vrot.lane.b32.xlu0 %v318, 123
    %v329 = vpop.permute.xlu0 %328
    %330 = vrot.lane.b32.xlu0 %v319, 123
    %v331 = vpop.permute.xlu0 %330
    %vm332 = vcmask 1006592
    %v333 = vsel %vm332, %v325, %v327
    %v334 = vsel %vm332, %v329, %v331
    %v337 = vadd.f32 %v312, %v333
    %v338 = vadd.f32 %v313, %v334
    %s339 = sld [smem:[#allocation2 + $0x6]]
    %v340 = vstv %s339
    %v341 = vmul.f32 %v340, %v183
    %v342 = vmul.f32 %v340, %v193
    %v343 = vmul.f32 %v340, %v200
    %v344 = vmul.f32 %v340, %v209
    %349 = vrot.lane.b32.xlu0 %v341, 122
    %v350 = vpop.permute.xlu0 %349
    %351 = vrot.lane.b32.xlu0 %v342, 122
    %v352 = vpop.permute.xlu0 %351
    %353 = vrot.lane.b32.xlu0 %v343, 122
    %v354 = vpop.permute.xlu0 %353
    %355 = vrot.lane.b32.xlu0 %v344, 122
    %v356 = vpop.permute.xlu0 %355
    %vm357 = vcmask 998400
    %v358 = vsel %vm357, %v350, %v352
    %v359 = vsel %vm357, %v354, %v356
    %v362 = vadd.f32 %v337, %v358
    %v363 = vadd.f32 %v338, %v359
    %s364 = sld [smem:[#allocation2 + $0x7]]
    %v365 = vstv %s364
    %v366 = vmul.f32 %v365, %v183
    %v367 = vmul.f32 %v365, %v193
    %v368 = vmul.f32 %v365, %v200
    %v369 = vmul.f32 %v365, %v209
    %374 = vrot.lane.b32.xlu0 %v366, 121
    %v375 = vpop.permute.xlu0 %374
    %376 = vrot.lane.b32.xlu0 %v367, 121
    %v377 = vpop.permute.xlu0 %376
    %378 = vrot.lane.b32.xlu0 %v368, 121
    %v379 = vpop.permute.xlu0 %378
    %380 = vrot.lane.b32.xlu0 %v369, 121
    %v381 = vpop.permute.xlu0 %380
    %vm382 = vcmask 990208
    %v383 = vsel %vm382, %v375, %v377
    %v384 = vsel %vm382, %v379, %v381
    %v387 = vadd.f32 %v362, %v383
    %v388 = vadd.f32 %v363, %v384
    %s389 = sld [smem:[#allocation7 + $0x2]]
    %v390 = vstv %s389
    %v391 = vadd.f32 %v387, %v390
    %v392 = vadd.f32 %v388, %v390
    %v393 = vand.u32 2147483647, %v391
    %v394 = vand.u32 2147483647, %v392
    %v397 = vrot.slane %v394, 7
    %vm398 = vcmask 1041409
    %v399 = vsel %vm398, %v397, %v393
    %401 = vst [vmem:[#allocation11] sm:$0x3] %v399
    // Predicated region
    $region34: #{tpu_custom_call.1} parent=1 // pred_check
      _
    $region35: #{tpu_custom_call.1} parent=1 // pred_check_branch
      %403 = sbr.rel (0) target = $region37
    $region36: #{tpu_custom_call.1} parent=1 // pred_region
      %s405 = ssub.s32 32, 32
      %406 = vsyncadd [#allocation4], %s405
      %s408 = sshll.u32 [#allocation11], 4
      %s409 = int_to_ptr.vmem [resolvable:$true] %s408
      %411 = dma.vmem_to_hbm [thread:$0]  %s409, 32, %s4, [#allocation4]
    $region37: #{tpu_custom_call.1} parent=1 // pred_fallthru
      _
    // Predicated region
    $region38: #{tpu_custom_call.1} parent=1 // pred_check
      _
    $region39: #{tpu_custom_call.1} parent=1 // pred_check_branch
      %413 = sbr.rel (0) target = $region41
    $region40: #{tpu_custom_call.1} parent=1 // pred_region
      %414 = dma.done [#allocation4], 32
    $region41: #{tpu_custom_call.1} parent=1 // pred_fallthru
      _
    %415 = vsyncpa [#allocation3], 1
    %416 = vsyncpa [#allocation10], 1
    %417 = vsyncpa [#allocation4], 1
    %418 = vsyncpa [#allocation5], 1
    %419 = vsyncpa [#allocation6], 1

</llo_original>
